<compile_context>
chip_gen: v7x
topology: tpu7x:2x2x1
jax: 0.10.0
libtpu: 0.0.40
codegen_flags: <defaults>
</compile_context>

<pallas_src>
import jax
import jax.numpy as jnp
from jax import lax
from jax.experimental import pallas as pl
from jax.experimental.pallas import tpu as pltpu

B = 8      # batch
D = 32     # dense_input_dim
C = 16     # num_classes  (label_dim == 1 -> class-id labels, one-hot in kernel)
EPS = 1e-7
OUT_LANES = 128   # lane-dense scalar-output slab: [loss, f1, 0, ...]


def _reduce_all_11(x):
    # full reduce to a (1, 1) tile: lane reduce first, then sublane reduce
    return jnp.sum(jnp.sum(x, axis=1, keepdims=True), axis=0, keepdims=True)


def supervised_kernel(lab_ref, x_ref, w_ref, out_ref):
    # lab_ref: VMEM (B, 1) int32  class ids (label_dim == 1)
    # x_ref  : VMEM (B, D)        encoder output (encoder == identity, see TODO)
    # w_ref  : VMEM (D, C)        dense weight (use_bias=False)
    # out_ref: VMEM (1, OUT_LANES) f32  lane-dense slab [loss, f1, 0, ...]
    x = x_ref[...].astype(jnp.float32)
    w = w_ref[...].astype(jnp.float32)
    # TODO(synk): on v6e/v7x cast x/w to bf16 for the MXU once the real encoder
    # is fused and D/C reach MXU granularity; at these toy shapes f32 is kept
    # for bit-parity with the reference.
    logits = jnp.dot(x, w, preferred_element_type=jnp.float32)       # [B, C]

    # Vectorized one-hot mask: one compare of the class-id column against a
    # lane iota (no per-row loop, no scalar reads feeding the vector path).
    col = lax.broadcasted_iota(jnp.int32, (B, C), 1)
    onehot = col == lab_ref[...]                                     # bool [B, C]

    # multi_label_sm (MultiLabelSoftMarginLoss):
    #   mean[ y*softplus(-z) + (1-y)*softplus(z) ]  ==  mean[ softplus(z) - y*z ]
    # and y*z is just the logit at the label column -> one select, one reduce.
    sp = jnp.maximum(logits, 0.0) + jnp.log1p(jnp.exp(-jnp.abs(logits)))
    loss = _reduce_all_11(sp - jnp.where(onehot, logits, 0.0)) * (1.0 / (B * C))

    # predictions = floor(sigmoid(z) + 0.5)  <=>  z >= 0
    pred_pos = logits >= 0.0

    # micro F1 using the one-hot invariants: tp+fp = sum(preds), tp+fn = B.
    tp = _reduce_all_11(jnp.where(onehot & pred_pos, 1.0, 0.0))
    sum_preds = _reduce_all_11(jnp.where(pred_pos, 1.0, 0.0))
    precision = tp / (sum_preds + EPS)
    recall = tp / (float(B) + EPS)
    f1 = 2.0 * precision * recall / (precision + recall + EPS)       # (1, 1)

    # Pack both scalars into one lane-dense (1, 128) block -> unmasked vst,
    # single tiny writeback instead of two masked (1,1) outputs.
    lane = lax.broadcasted_iota(jnp.int32, (1, OUT_LANES), 1)
    out_ref[...] = (jnp.where(lane == 0, loss, 0.0)
                    + jnp.where(lane == 1, f1, 0.0))


def supervised_forward(features, dense_weight, label_ids):
    # convert_labels_tensor: label_dim == 1 -> labels are class ids; the
    # one-hot expansion happens inside the kernel (no host one_hot op, no
    # [B,C] f32 label stream).
    lab = label_ids.astype(jnp.int32).reshape(B, 1)

    # TODO(synk): encoder() raises NotImplementedError in the module; identity
    # passthrough here.  A real encoder should be fused into this same
    # pallas_call so the matmul + loss/F1 epilogue rides for free behind the
    # encoder's MXU/DMA work; at that point make B a 'parallel' grid axis
    # (v7x: 2 TensorCores) and size blocks against the generation's VMEM.
    packed = pl.pallas_call(
        supervised_kernel,
        # No grid: single invocation, whole arrays resident in VMEM.
        in_specs=[
            pl.BlockSpec(memory_space=pltpu.MemorySpace.VMEM),   # label ids
            pl.BlockSpec(memory_space=pltpu.MemorySpace.VMEM),   # features
            pl.BlockSpec(memory_space=pltpu.MemorySpace.VMEM),   # dense weight
        ],
        out_specs=pl.BlockSpec(memory_space=pltpu.MemorySpace.VMEM),
        out_shape=jax.ShapeDtypeStruct((1, OUT_LANES), jnp.float32),
    )(lab, features, dense_weight)

    # Module forward returns OrderedDict(loss=..., f1_score=...).
    return {"loss": packed[0, 0], "f1_score": packed[0, 1]}


def _reference(features, dense_weight, label_ids):
    labels = jax.nn.one_hot(jnp.squeeze(label_ids, axis=-1).astype(jnp.int32),
                            C, dtype=jnp.float32)
    logits = features.astype(jnp.float32) @ dense_weight.astype(jnp.float32)
    per_elem = (labels * jax.nn.softplus(-logits)
                + (1.0 - labels) * jax.nn.softplus(logits))
    loss = jnp.mean(per_elem)
    preds = (jax.nn.sigmoid(logits) >= 0.5).astype(jnp.float32)
    tp = jnp.sum(preds * labels)
    fp = jnp.sum(preds * (1.0 - labels))
    fn = jnp.sum((1.0 - preds) * labels)
    p = tp / (tp + fp + EPS)
    r = tp / (tp + fn + EPS)
    return loss, 2 * p * r / (p + r + EPS)


if __name__ == "__main__":
    key = jax.random.PRNGKey(0)
    k_feat, k_w, k_lab = jax.random.split(key, 3)

    features = jax.random.normal(k_feat, (B, D), dtype=jnp.float32)
    # deterministic param init for Dense(dense_input_dim, num_classes, use_bias=False)
    dense_weight = jax.random.normal(k_w, (D, C), dtype=jnp.float32) * 0.1
    label_ids = jax.random.randint(k_lab, (B, 1), 0, C)   # label_dim == 1

    out = supervised_forward(features, dense_weight, label_ids)
    jax.block_until_ready(out)

    ref_loss, ref_f1 = _reference(features, dense_weight, label_ids)
    assert jnp.allclose(out["loss"], ref_loss, atol=1e-4), (out["loss"], ref_loss)
    assert jnp.allclose(out["f1_score"], ref_f1, atol=1e-4), (out["f1_score"], ref_f1)

    print("KERNEL_OK")
</pallas_src>

<mosaic_0001>
module attributes {stable_mosaic.version = 11 : i64} {
  func.func @supervised_kernel(%arg0: memref<8x1xi32, #tpu.memory_space<vmem>>, %arg1: memref<8x32xf32, #tpu.memory_space<vmem>>, %arg2: memref<32x16xf32, #tpu.memory_space<vmem>>, %arg3: memref<1x128xf32, #tpu.memory_space<vmem>>) attributes {dimension_semantics = [], scalar_prefetch = 0 : i64, scratch_operands = 0 : i64, tpu.core_type = #tpu.core_type<tc>} {
    %c0 = arith.constant 0 : index
    %c0_0 = arith.constant 0 : index
    %0 = vector.load %arg1[%c0, %c0_0] : memref<8x32xf32, #tpu.memory_space<vmem>>, vector<8x32xf32>
    %c0_1 = arith.constant 0 : index
    %c0_2 = arith.constant 0 : index
    %1 = vector.load %arg2[%c0_1, %c0_2] : memref<32x16xf32, #tpu.memory_space<vmem>>, vector<32x16xf32>
    %cst = arith.constant dense<0.000000e+00> : vector<8x16xf32>
    %2 = tpu.matmul %0, %1, %cst {dimension_numbers = #tpu.dot_dimension_numbers<[1], [0], [0], [1], [0, 0, 1, 1], [], []>} : vector<8x32xf32>, vector<32x16xf32>, vector<8x16xf32> -> vector<8x16xf32>
    %3 = tpu.iota {dimensions = array<i32: 1>} : vector<8x16xi32>
    %c0_3 = arith.constant 0 : index
    %c0_4 = arith.constant 0 : index
    %4 = vector.load %arg0[%c0_3, %c0_4] : memref<8x1xi32, #tpu.memory_space<vmem>>, vector<8x1xi32>
    %5 = vector.broadcast %4 : vector<8x1xi32> to vector<8x16xi32>
    %6 = arith.cmpi eq, %3, %5 : vector<8x16xi32>
    %cst_5 = arith.constant 0.000000e+00 : f32
    %7 = vector.broadcast %cst_5 : f32 to vector<8x16xf32>
    %8 = arith.maximumf %2, %7 : vector<8x16xf32>
    %9 = math.absf %2 : vector<8x16xf32>
    %cst_6 = arith.constant 0.000000e+00 : f32
    %10 = vector.broadcast %cst_6 : f32 to vector<8x16xf32>
    %11 = arith.subf %10, %9 : vector<8x16xf32>
    %12 = math.exp %11 : vector<8x16xf32>
    %13 = math.log1p %12 : vector<8x16xf32>
    %14 = arith.addf %8, %13 : vector<8x16xf32>
    %cst_7 = arith.constant 0.000000e+00 : f32
    %15 = vector.broadcast %cst_7 : f32 to vector<8x16xf32>
    %16 = arith.select %6, %2, %15 : vector<8x16xi1>, vector<8x16xf32>
    %17 = arith.subf %14, %16 : vector<8x16xf32>
    %cst_8 = arith.constant dense<0.000000e+00> : vector<8xf32>
    %18 = vector.multi_reduction <add>, %17, %cst_8 [1] : vector<8x16xf32> to vector<8xf32>
    %19 = vector.shape_cast %18 : vector<8xf32> to vector<8x1xf32>
    %cst_9 = arith.constant dense<0.000000e+00> : vector<1xf32>
    %20 = vector.multi_reduction <add>, %19, %cst_9 [0] : vector<8x1xf32> to vector<1xf32>
    %21 = vector.shape_cast %20 : vector<1xf32> to vector<1x1xf32>
    %cst_10 = arith.constant 7.812500e-03 : f32
    %22 = vector.broadcast %cst_10 : f32 to vector<1x1xf32>
    %23 = arith.mulf %21, %22 : vector<1x1xf32>
    %cst_11 = arith.constant 0.000000e+00 : f32
    %24 = vector.broadcast %cst_11 : f32 to vector<8x16xf32>
    %25 = arith.cmpf oge, %2, %24 : vector<8x16xf32>
    %26 = arith.andi %6, %25 : vector<8x16xi1>
    %cst_12 = arith.constant 1.000000e+00 : f32
    %cst_13 = arith.constant 0.000000e+00 : f32
    %27 = vector.broadcast %cst_12 : f32 to vector<8x16xf32>
    %28 = vector.broadcast %cst_13 : f32 to vector<8x16xf32>
    %29 = arith.select %26, %27, %28 : vector<8x16xi1>, vector<8x16xf32>
    %cst_14 = arith.constant dense<0.000000e+00> : vector<8xf32>
    %30 = vector.multi_reduction <add>, %29, %cst_14 [1] : vector<8x16xf32> to vector<8xf32>
    %31 = vector.shape_cast %30 : vector<8xf32> to vector<8x1xf32>
    %cst_15 = arith.constant dense<0.000000e+00> : vector<1xf32>
    %32 = vector.multi_reduction <add>, %31, %cst_15 [0] : vector<8x1xf32> to vector<1xf32>
    %33 = vector.shape_cast %32 : vector<1xf32> to vector<1x1xf32>
    %cst_16 = arith.constant 1.000000e+00 : f32
    %cst_17 = arith.constant 0.000000e+00 : f32
    %34 = vector.broadcast %cst_16 : f32 to vector<8x16xf32>
    %35 = vector.broadcast %cst_17 : f32 to vector<8x16xf32>
    %36 = arith.select %25, %34, %35 : vector<8x16xi1>, vector<8x16xf32>
    %cst_18 = arith.constant dense<0.000000e+00> : vector<8xf32>
    %37 = vector.multi_reduction <add>, %36, %cst_18 [1] : vector<8x16xf32> to vector<8xf32>
    %38 = vector.shape_cast %37 : vector<8xf32> to vector<8x1xf32>
    %cst_19 = arith.constant dense<0.000000e+00> : vector<1xf32>
    %39 = vector.multi_reduction <add>, %38, %cst_19 [0] : vector<8x1xf32> to vector<1xf32>
    %40 = vector.shape_cast %39 : vector<1xf32> to vector<1x1xf32>
    %cst_20 = arith.constant 1.000000e-07 : f32
    %41 = vector.broadcast %cst_20 : f32 to vector<1x1xf32>
    %42 = arith.addf %40, %41 : vector<1x1xf32>
    %43 = arith.divf %33, %42 : vector<1x1xf32>
    %cst_21 = arith.constant 8.000000e+00 : f32
    %44 = vector.broadcast %cst_21 : f32 to vector<1x1xf32>
    %45 = arith.divf %33, %44 : vector<1x1xf32>
    %cst_22 = arith.constant 2.000000e+00 : f32
    %46 = vector.broadcast %cst_22 : f32 to vector<1x1xf32>
    %47 = arith.mulf %46, %43 : vector<1x1xf32>
    %48 = arith.mulf %47, %45 : vector<1x1xf32>
    %49 = arith.addf %43, %45 : vector<1x1xf32>
    %cst_23 = arith.constant 1.000000e-07 : f32
    %50 = vector.broadcast %cst_23 : f32 to vector<1x1xf32>
    %51 = arith.addf %49, %50 : vector<1x1xf32>
    %52 = arith.divf %48, %51 : vector<1x1xf32>
    %53 = tpu.iota {dimensions = array<i32: 1>} : vector<1x128xi32>
    %c0_i32 = arith.constant 0 : i32
    %54 = vector.broadcast %c0_i32 : i32 to vector<1x128xi32>
    %55 = arith.cmpi eq, %53, %54 : vector<1x128xi32>
    %cst_24 = arith.constant 0.000000e+00 : f32
    %56 = vector.shape_cast %23 : vector<1x1xf32> to vector<1x1xf32>
    %57 = vector.broadcast %56 : vector<1x1xf32> to vector<1x128xf32>
    %58 = vector.broadcast %cst_24 : f32 to vector<1x128xf32>
    %59 = arith.select %55, %57, %58 : vector<1x128xi1>, vector<1x128xf32>
    %c1_i32 = arith.constant 1 : i32
    %60 = vector.broadcast %c1_i32 : i32 to vector<1x128xi32>
    %61 = arith.cmpi eq, %53, %60 : vector<1x128xi32>
    %cst_25 = arith.constant 0.000000e+00 : f32
    %62 = vector.shape_cast %52 : vector<1x1xf32> to vector<1x1xf32>
    %63 = vector.broadcast %62 : vector<1x1xf32> to vector<1x128xf32>
    %64 = vector.broadcast %cst_25 : f32 to vector<1x128xf32>
    %65 = arith.select %61, %63, %64 : vector<1x128xi1>, vector<1x128xf32>
    %66 = arith.addf %59, %65 : vector<1x128xf32>
    %c0_26 = arith.constant 0 : index
    %c0_27 = arith.constant 0 : index
    %67 = vector.load %arg3[%c0_26, %c0_27] : memref<1x128xf32, #tpu.memory_space<vmem>>, vector<1x128xf32>
    tpu.vector_store %arg3[%c0_26, %c0_27], %66 {strides = array<i32>} : memref<1x128xf32, #tpu.memory_space<vmem>>, vector<1x128xf32>,
    return
  }
}

</mosaic_0001>

<llo_original>
// kernel: tpu_custom_call.1
$region0: #{tpu_custom_call.1}
  #allocation0 [shape = 'u32[]', space=smem, size = 0x4, offset = 0x4, fixed_abs, tag = 'smem constant byte address 0x4 - core index']
  #allocation1 [shape = 'u32[144,128]{1,0:T(1,128)}', space=vmem, size = 0x12000, scoped, tag = 'internal scratch']
  %s0 = inlined_call_operand.vmem [shape: s32[8,1], index: 0, kind: input, shape index: {}]
  %s1 = inlined_call_operand.vmem [shape: f32[8,32], index: 1, kind: input, shape index: {}]
  %s2 = inlined_call_operand.vmem [shape: f32[32,16], index: 2, kind: input, shape index: {}]
  %s3 = inlined_call_operand.hbm [shape: f32[1,128], index: 3, kind: output, shape index: {}]
  %s4 = sld [smem:[#allocation0]]
  $region22: #{tpu_custom_call.1} parent=0
    _
  %s6 = ssub.s32 1, %s4
  %s7 = scalar_select 0, %s6, %s4
  $region1: #{tpu_custom_call.1} parent=0
    #allocation2 [shape = 'u8[512]{0}', space=vmem, size = 0x400, scoped, tag = 'output window, operand 0, single buffered']
    #allocation3 [shape = 's32[1]{0}', space=sflag, size = 0x4, scoped, tag = 'scoped memory for tpu_custom_call.1']
    %8 = vsyncpa [#allocation3], 0
    // Predicated region
    $region2: #{tpu_custom_call.1} parent=1 // pred_check
      _
    $region3: #{tpu_custom_call.1} parent=1 // pred_check_branch
      %10 = sbr.rel (0) target = $region5
    $region4: #{tpu_custom_call.1} parent=1 // pred_region
      _
    $region5: #{tpu_custom_call.1} parent=1 // pred_fallthru
      _
    // Predicated region
    $region6: #{tpu_custom_call.1} parent=1 // pred_check
      _
    $region7: #{tpu_custom_call.1} parent=1 // pred_check_branch
      %12 = sbr.rel (0) target = $region9
    $region8: #{tpu_custom_call.1} parent=1 // pred_region
      _
    $region9: #{tpu_custom_call.1} parent=1 // pred_fallthru
      _
    // Predicated region
    $region10: #{tpu_custom_call.1} parent=1 // pred_check
      _
    $region11: #{tpu_custom_call.1} parent=1 // pred_check_branch
      %14 = sbr.rel (0) target = $region13
    $region12: #{tpu_custom_call.1} parent=1 // pred_region
      _
    $region13: #{tpu_custom_call.1} parent=1 // pred_fallthru
      _
    %v15 = vld [vmem:[%s1] sm:$0xff]
    %v16 = vld [vmem:[%s2] sm:$0xff]
    %v17 = vld [vmem:[%s2 + $0x8] sm:$0xff]
    %v18 = vld [vmem:[%s2 + $0x10] sm:$0xff]
    %v19 = vld [vmem:[%s2 + $0x18] sm:$0xff]
    %vm20 = vcmask 261120
    %v22 = vsel %vm20, %v15, 0
    %24 = vmatprep.subr.mxu0 0.0
    %25 = vmatpush1.msra.mxu0 %v16
    %26 = vmatprep.subr.mxu0 0.0
    %27 = vmatpush1.msra.mxu0 %v17
    %28 = vmatprep.subr.mxu0 0.0
    %29 = vmatpush1.msra.mxu0 %v18
    %30 = vmatprep.subr.mxu0 0.0
    %31 = vmatpush1.msra.mxu0 %v19
    %32 = vmatprep.subr.mxu0 0.0
    %33 = vmatpush1.msra.mxu0 0.0
    %34 = vmatprep.subr.mxu0 0.0
    %35 = vmatpush1.msra.mxu0 0.0
    %36 = vmatprep.subr.mxu0 0.0
    %37 = vmatpush1.msra.mxu0 0.0
    %38 = vmatprep.subr.mxu0 0.0
    %39 = vmatpush1.msra.mxu0 0.0
    %40 = vmatprep.subr.mxu0 0.0
    %41 = vmatpush1.msra.mxu0 0.0
    %42 = vmatprep.subr.mxu0 0.0
    %43 = vmatpush1.msra.mxu0 0.0
    %44 = vmatprep.subr.mxu0 0.0
    %45 = vmatpush1.msra.mxu0 0.0
    %46 = vmatprep.subr.mxu0 0.0
    %47 = vmatpush1.msra.mxu0 0.0
    %48 = vmatprep.subr.mxu0 0.0
    %49 = vmatpush1.msra.mxu0 0.0
    %50 = vmatprep.subr.mxu0 0.0
    %51 = vmatpush1.msra.mxu0 0.0
    %52 = vmatprep.subr.mxu0 0.0
    %53 = vmatpush1.msra.mxu0 0.0
    %54 = vmatprep.subr.mxu0 0.0
    %55 = vmatpush1.msra.mxu0 0.0
    %56 = vmatprep.subr.mxu0 0.0
    %57 = vmatpush1.msra.mxu0 0.0
    %58 = vmatprep.subr.mxu0 0.0
    %59 = vmatpush1.msra.mxu0 0.0
    %60 = vmatprep.subr.mxu0 0.0
    %61 = vmatpush1.msra.mxu0 0.0
    %62 = vmatprep.subr.mxu0 0.0
    %63 = vmatpush1.msra.mxu0 0.0
    %64 = vmatprep.subr.mxu0 0.0
    %65 = vmatpush1.msra.mxu0 0.0
    %66 = vmatprep.subr.mxu0 0.0
    %67 = vmatpush1.msra.mxu0 0.0
    %68 = vmatprep.subr.mxu0 0.0
    %69 = vmatpush1.msra.mxu0 0.0
    %70 = vmatprep.subr.mxu0 0.0
    %71 = vmatpush1.msra.mxu0 0.0
    %72 = vmatprep.subr.mxu0 0.0
    %73 = vmatpush1.msra.mxu0 0.0
    %74 = vmatprep.subr.mxu0 0.0
    %75 = vmatpush1.msra.mxu0 0.0
    %76 = vmatprep.subr.mxu0 0.0
    %77 = vmatpush1.msra.mxu0 0.0
    %78 = vmatprep.subr.mxu0 0.0
    %79 = vmatpush1.msra.mxu0 0.0
    %80 = vmatprep.subr.mxu0 0.0
    %81 = vmatpush1.msra.mxu0 0.0
    %82 = vmatprep.subr.mxu0 0.0
    %83 = vmatpush1.msra.mxu0 0.0
    %84 = vmatprep.subr.mxu0 0.0
    %85 = vmatpush1.msra.mxu0 0.0
    %86 = vmatprep.subr.mxu0 0.0
    %87 = vmatpush1.msra.mxu0 0.0
    %88 = vmatprep.mubr.f32.mxu0 0.0
    %89 = vmatmul.mubr.f32.gmra.mrb[0].mxu0 %v22
    %v90 = vpop.f32.mrb[0].mxu0
    %v91 = vadd.f32 0.0, %v90
    %v92 = vpop.f32.mrb[0].mxu0
    %93 = vdwg.mxu0
    %v94 = vlaneseq
    %v95 = vand.u32 %v94, 127
    %v96 = vld [vmem:[%s0] sm:$0xff]
    %97 = vset.pattern.permute.xlu0 0
    %98 = vperm.xlu0 %97, %v96
    %v99 = vpop.permute.xlu0 %98
    %vm100 = vcmp.eq.s32.totalorder %v95, %v99
    %v101 = vmax.f32 %v91, 0.0
    %v102 = vand.u32 2147483647, %v91
    %v103 = vsub.f32 0.0, %v102
    %v104 = vmul.f32 %v103, 1.442695
    %v105 = vpow.pop %v104
    %v106 = vadd.f32 %v105, 1.0
    %v107 = vlog2.pop %v106
    %v108 = vmul.f32 %v107, 0.6931472
    %v109 = vmul.f32 -0.5, %v105
    %v110 = vadd.f32 %v109, 1.0
    %v111 = vmul.f32 %v110, %v105
    %v112 = vand.u32 2147483647, %v105
    %vm113 = vcmp.lt.f32.partialorder %v112, 0.0004427343
    %v114 = vsel %vm113, %v111, %v108
    %v115 = vadd.f32 %v101, %v114
    %v116 = vsel %vm100, %v91, 0.0
    %v117 = vsub.f32 %v115, %v116
    %vm118 = vcmask 130048
    %v119 = vsel %vm118, %v117, 0.0
    %120 = vadd.xlane.f32.xlu0 %v119
    %v121 = vpop.xlane.xlu0 %120
    %v122 = vrot.slane %v121, 4
    %v123 = vadd.f32 %v121, %v122
    %v124 = vrot.slane %v123, 2
    %v125 = vadd.f32 %v123, %v124
    %v126 = vrot.slane %v125, 1
    %v127 = vadd.f32 %v125, %v126
    %v128 = vmul.f32 %v127, 0.0078125
    %vm129 = vcmp.ge.f32.partialorder %v91, 0.0
    %vm130 = vmand %vm100, %vm129
    %v131 = vsel %vm130, 1.0, 0.0
    %v132 = vsel %vm118, %v131, 0.0
    %133 = vadd.xlane.f32.xlu0 %v132
    %v134 = vpop.xlane.xlu0 %133
    %v135 = vrot.slane %v134, 4
    %v136 = vadd.f32 %v134, %v135
    %v137 = vrot.slane %v136, 2
    %v138 = vadd.f32 %v136, %v137
    %v139 = vrot.slane %v138, 1
    %v140 = vadd.f32 %v138, %v139
    %v141 = vsel %vm129, 1.0, 0.0
    %v142 = vsel %vm118, %v141, 0.0
    %143 = vadd.xlane.f32.xlu0 %v142
    %v144 = vpop.xlane.xlu0 %143
    %v145 = vrot.slane %v144, 4
    %v146 = vadd.f32 %v144, %v145
    %v147 = vrot.slane %v146, 2
    %v148 = vadd.f32 %v146, %v147
    %v149 = vrot.slane %v148, 1
    %v150 = vadd.f32 %v148, %v149
    %v151 = vadd.f32 %v150, 1e-07
    %v152 = vrcp.pop %v151
    %v153 = vmul.f32 %v140, %v152
    %v154 = vrcp.pop 8.0
    %v155 = vmul.f32 %v140, %v154
    %v156 = vmul.f32 %v153, 2.0
    %v157 = vmul.f32 %v156, %v155
    %v158 = vadd.f32 %v153, %v155
    %v159 = vadd.f32 %v158, 1e-07
    %v160 = vrcp.pop %v159
    %v161 = vmul.f32 %v157, %v160
    %vm162 = vcmp.eq.s32.totalorder %v95, 0
    %v163 = vsel %vm162, %v128, 0.0
    %vm164 = vcmp.eq.s32.totalorder %v95, 1
    %v165 = vsel %vm164, %v161, 0.0
    %v166 = vadd.f32 %v163, %v165
    %167 = vst [vmem:[#allocation2] sm:$0x1] %v166
    // Predicated region
    $region14: #{tpu_custom_call.1} parent=1 // pred_check
      _
    $region15: #{tpu_custom_call.1} parent=1 // pred_check_branch
      %169 = sbr.rel (0) target = $region17
    $region16: #{tpu_custom_call.1} parent=1 // pred_region
      %s171 = ssub.s32 16, 16
      %172 = vsyncadd [#allocation3], %s171
      %s174 = sshll.u32 [#allocation2], 4
      %s175 = int_to_ptr.vmem [resolvable:$true] %s174
      %177 = dma.vmem_to_hbm [thread:$0]  %s175, 16, %s3, [#allocation3]
    $region17: #{tpu_custom_call.1} parent=1 // pred_fallthru
      _
    // Predicated region
    $region18: #{tpu_custom_call.1} parent=1 // pred_check
      _
    $region19: #{tpu_custom_call.1} parent=1 // pred_check_branch
      %179 = sbr.rel (0) target = $region21
    $region20: #{tpu_custom_call.1} parent=1 // pred_region
      %180 = dma.done [#allocation3], 16
    $region21: #{tpu_custom_call.1} parent=1 // pred_fallthru
      _
    %181 = vsyncpa [#allocation3], 1

</llo_original>
